<compile_context>
chip_gen: v7x
topology: tpu7x:2x2x1
jax: 0.10.0
libtpu: 0.0.40
codegen_flags: <defaults>
</compile_context>

<pallas_src>
import functools

import jax
import jax.numpy as jnp
from jax.experimental import pallas as pl
from jax.experimental.pallas import tpu as pltpu

_LANE = 128
_SUBLANE = 8
_MAX_TM = 512  # rows per batch tile; >=512 tiles reach ~85% of HBM roofline


def _round_up(n, m):
    return ((n + m - 1) // m) * m


def _ffnn_kernel(x_ref, w1_ref, b1_ref, w2_ref, b2_ref, w3_ref, b3_ref, o_ref):
    """One batch tile of the fused 3-layer MLP; all weights VMEM-resident."""
    x = x_ref[...]            # (TM, Dp) bf16
    # Read biases once (no in-kernel loop, so no repeated broadcast_in_dim).
    b1 = b1_ref[...]          # (1, Hp) f32
    b2 = b2_ref[...]
    b3 = b3_ref[...]

    # Layer 1: bf16 MXU matmul, f32 accumulation; bias + ReLU in f32.
    h = jnp.dot(x, w1_ref[...], preferred_element_type=jnp.float32) + b1
    h = jnp.maximum(h, 0.0)

    # Layer 2.
    h = jnp.dot(h.astype(w2_ref.dtype), w2_ref[...],
                preferred_element_type=jnp.float32) + b2
    h = jnp.maximum(h, 0.0)

    # Output layer (lane-padded to a multiple of 128; wrapper slices it back).
    out = jnp.dot(h.astype(w3_ref.dtype), w3_ref[...],
                  preferred_element_type=jnp.float32) + b3
    o_ref[...] = out.astype(o_ref.dtype)


def prepare_params(params, compute_dtype=jnp.bfloat16):
    """Zero-pad feature dims to multiples of 128 lanes; cast weights to bf16.

    Padding is mathematically exact: padded x/w1 rows are zero, ReLU(0)=0,
    and the padded rows of w2/w3 are zero, so padded lanes never contribute.
    """
    w1, b1, w2, b2, w3, b3 = params
    d, h = w1.shape
    o = w3.shape[1]
    dp = _round_up(d, _LANE)
    hp = _round_up(h, _LANE)
    op = _round_up(o, _LANE)

    w1p = jnp.zeros((dp, hp), compute_dtype).at[:d, :h].set(w1.astype(compute_dtype))
    b1p = jnp.zeros((1, hp), jnp.float32).at[:, :h].set(b1.astype(jnp.float32).reshape(1, h))
    w2p = jnp.zeros((hp, hp), compute_dtype).at[:h, :h].set(w2.astype(compute_dtype))
    b2p = jnp.zeros((1, hp), jnp.float32).at[:, :h].set(b2.astype(jnp.float32).reshape(1, h))
    w3p = jnp.zeros((hp, op), compute_dtype).at[:h, :o].set(w3.astype(compute_dtype))
    b3p = jnp.zeros((1, op), jnp.float32).at[:, :o].set(b3.astype(jnp.float32).reshape(1, o))
    return (w1p, b1p, w2p, b2p, w3p, b3p)


@functools.partial(jax.jit, static_argnames=("out_size",))
def discriminator_simple_forward(x_nchw, padded_params, out_size):
    """x_nchw: (B, C, H, W).  Returns (B, out_size) float32."""
    w1p, b1p, w2p, b2p, w3p, b3p = padded_params
    b = x_nchw.shape[0]
    d = 1
    for s in x_nchw.shape[1:]:
        d *= s
    dp, hp = w1p.shape
    op = w3p.shape[1]
    compute_dtype = w1p.dtype

    # torch.nn.Flatten semantics: contiguous (B, C*H*W).
    x_flat = x_nchw.reshape(b, d).astype(compute_dtype)
    if d != dp:
        x_flat = jnp.pad(x_flat, ((0, 0), (0, dp - d)))

    # Batch tile size: multiple of 8 sublanes, capped at _MAX_TM.
    tm = min(_MAX_TM, _round_up(b, _SUBLANE))
    bp = _round_up(b, tm)
    if bp != b:
        x_flat = jnp.pad(x_flat, ((0, bp - b), (0, 0)))
    grid = (bp // tm,)

    out_padded = pl.pallas_call(
        _ffnn_kernel,
        grid=grid,
        out_shape=jax.ShapeDtypeStruct((bp, op), jnp.float32),
        in_specs=[
            pl.BlockSpec((tm, dp), lambda i: (i, 0)),   # x: tiled over batch
            pl.BlockSpec((dp, hp), lambda i: (0, 0)),   # w1: resident
            pl.BlockSpec((1, hp), lambda i: (0, 0)),    # b1: resident
            pl.BlockSpec((hp, hp), lambda i: (0, 0)),   # w2: resident
            pl.BlockSpec((1, hp), lambda i: (0, 0)),    # b2: resident
            pl.BlockSpec((hp, op), lambda i: (0, 0)),   # w3: resident
            pl.BlockSpec((1, op), lambda i: (0, 0)),    # b3: resident
        ],
        out_specs=pl.BlockSpec((tm, op), lambda i: (i, 0)),
        compiler_params=pltpu.CompilerParams(
            dimension_semantics=("parallel",),          # megacore on v7x
        ),
    )(x_flat, w1p, b1p, w2p, b2p, w3p, b3p)

    return out_padded[:b, :out_size]


def init_params(key, in_size, hidden_size, out_size):
    """Deterministic Kaiming-ish init; biases kept 2D (1, n) for TPU layout."""
    k1, k2, k3 = jax.random.split(key, 3)
    w1 = jax.random.normal(k1, (in_size, hidden_size), jnp.float32) * (1.0 / jnp.sqrt(in_size))
    b1 = jnp.zeros((1, hidden_size), jnp.float32)
    w2 = jax.random.normal(k2, (hidden_size, hidden_size), jnp.float32) * (1.0 / jnp.sqrt(hidden_size))
    b2 = jnp.zeros((1, hidden_size), jnp.float32)
    w3 = jax.random.normal(k3, (hidden_size, out_size), jnp.float32) * (1.0 / jnp.sqrt(hidden_size))
    b3 = jnp.zeros((1, out_size), jnp.float32)
    return (w1, b1, w2, b2, w3, b3)


def reference_forward(x_nchw, params):
    """Pure-JAX f32 reference of the same forward pass (correctness check)."""
    b = x_nchw.shape[0]
    x = x_nchw.reshape(b, -1)
    w1, b1, w2, b2, w3, b3 = params
    h = jnp.maximum(x @ w1 + b1, 0.0)
    h = jnp.maximum(h @ w2 + b2, 0.0)
    return h @ w3 + b3


if __name__ == "__main__":
    # Small shapes consistent with a discriminator on image-like input.
    B, C, H, W = 2, 4, 16, 16
    in_size = C * H * W          # 1024 after Flatten
    hidden_size = 32
    out_size = 1                 # discriminator scalar score per sample

    key = jax.random.PRNGKey(0)
    kx, kp = jax.random.split(key)
    x = jax.random.normal(kx, (B, C, H, W), jnp.float32)
    params = init_params(kp, in_size, hidden_size, out_size)
    padded_params = prepare_params(params)

    y = discriminator_simple_forward(x, padded_params, out_size)
    jax.block_until_ready(y)

    y_ref = reference_forward(x, params)
    assert y.shape == (B, out_size)
    # bf16 matmuls with f32 accumulation -> loosened tolerance vs f32 reference.
    assert jnp.allclose(y, y_ref, atol=5e-2, rtol=5e-2), "mismatch vs reference"

    print("KERNEL_OK")
</pallas_src>

<mosaic_0001>
module attributes {stable_mosaic.version = 11 : i64} {
  func.func @_ffnn_kernel(%arg0: i32, %arg1: memref<8x1024xbf16, #tpu.memory_space<vmem>>, %arg2: memref<1024x128xbf16, #tpu.memory_space<vmem>>, %arg3: memref<1x128xf32, #tpu.memory_space<vmem>>, %arg4: memref<128x128xbf16, #tpu.memory_space<vmem>>, %arg5: memref<1x128xf32, #tpu.memory_space<vmem>>, %arg6: memref<128x128xbf16, #tpu.memory_space<vmem>>, %arg7: memref<1x128xf32, #tpu.memory_space<vmem>>, %arg8: memref<8x128xf32, #tpu.memory_space<vmem>>) attributes {dimension_semantics = [#tpu.dimension_semantics<parallel>], iteration_bounds = array<i64: 1>, scalar_prefetch = 0 : i64, scratch_operands = 0 : i64, tpu.core_type = #tpu.core_type<tc>, window_params = [{transform_indices = @transform_0, window_bounds = array<i64: 8, 1024>}, {pipeline_mode = #tpu.pipeline_mode<synchronous>, transform_indices = @transform_1, window_bounds = array<i64: 1024, 128>}, {pipeline_mode = #tpu.pipeline_mode<synchronous>, transform_indices = @transform_2, window_bounds = array<i64: 1, 128>}, {pipeline_mode = #tpu.pipeline_mode<synchronous>, transform_indices = @transform_3, window_bounds = array<i64: 128, 128>}, {pipeline_mode = #tpu.pipeline_mode<synchronous>, transform_indices = @transform_4, window_bounds = array<i64: 1, 128>}, {pipeline_mode = #tpu.pipeline_mode<synchronous>, transform_indices = @transform_5, window_bounds = array<i64: 128, 128>}, {pipeline_mode = #tpu.pipeline_mode<synchronous>, transform_indices = @transform_6, window_bounds = array<i64: 1, 128>}, {transform_indices = @transform_7, window_bounds = array<i64: 8, 128>}]} {
    %c0 = arith.constant 0 : index
    %c0_0 = arith.constant 0 : index
    %0 = vector.load %arg1[%c0, %c0_0] : memref<8x1024xbf16, #tpu.memory_space<vmem>>, vector<8x1024xbf16>
    %c0_1 = arith.constant 0 : index
    %c0_2 = arith.constant 0 : index
    %1 = vector.load %arg3[%c0_1, %c0_2] : memref<1x128xf32, #tpu.memory_space<vmem>>, vector<1x128xf32>
    %c0_3 = arith.constant 0 : index
    %c0_4 = arith.constant 0 : index
    %2 = vector.load %arg5[%c0_3, %c0_4] : memref<1x128xf32, #tpu.memory_space<vmem>>, vector<1x128xf32>
    %c0_5 = arith.constant 0 : index
    %c0_6 = arith.constant 0 : index
    %3 = vector.load %arg7[%c0_5, %c0_6] : memref<1x128xf32, #tpu.memory_space<vmem>>, vector<1x128xf32>
    %c0_7 = arith.constant 0 : index
    %c0_8 = arith.constant 0 : index
    %4 = vector.load %arg2[%c0_7, %c0_8] : memref<1024x128xbf16, #tpu.memory_space<vmem>>, vector<1024x128xbf16>
    %cst = arith.constant dense<0.000000e+00> : vector<8x128xf32>
    %5 = tpu.matmul %0, %4, %cst {dimension_numbers = #tpu.dot_dimension_numbers<[1], [0], [0], [1], [0, 0, 1, 1], [], []>} : vector<8x1024xbf16>, vector<1024x128xbf16>, vector<8x128xf32> -> vector<8x128xf32>
    %6 = vector.broadcast %1 : vector<1x128xf32> to vector<8x128xf32>
    %7 = arith.addf %5, %6 : vector<8x128xf32>
    %cst_9 = arith.constant 0.000000e+00 : f32
    %8 = vector.broadcast %cst_9 : f32 to vector<8x128xf32>
    %9 = arith.maximumf %7, %8 : vector<8x128xf32>
    %10 = arith.truncf %9 : vector<8x128xf32> to vector<8x128xbf16>
    %c0_10 = arith.constant 0 : index
    %c0_11 = arith.constant 0 : index
    %11 = vector.load %arg4[%c0_10, %c0_11] : memref<128x128xbf16, #tpu.memory_space<vmem>>, vector<128x128xbf16>
    %cst_12 = arith.constant dense<0.000000e+00> : vector<8x128xf32>
    %12 = tpu.matmul %10, %11, %cst_12 {dimension_numbers = #tpu.dot_dimension_numbers<[1], [0], [0], [1], [0, 0, 1, 1], [], []>} : vector<8x128xbf16>, vector<128x128xbf16>, vector<8x128xf32> -> vector<8x128xf32>
    %13 = vector.broadcast %2 : vector<1x128xf32> to vector<8x128xf32>
    %14 = arith.addf %12, %13 : vector<8x128xf32>
    %cst_13 = arith.constant 0.000000e+00 : f32
    %15 = vector.broadcast %cst_13 : f32 to vector<8x128xf32>
    %16 = arith.maximumf %14, %15 : vector<8x128xf32>
    %17 = arith.truncf %16 : vector<8x128xf32> to vector<8x128xbf16>
    %c0_14 = arith.constant 0 : index
    %c0_15 = arith.constant 0 : index
    %18 = vector.load %arg6[%c0_14, %c0_15] : memref<128x128xbf16, #tpu.memory_space<vmem>>, vector<128x128xbf16>
    %cst_16 = arith.constant dense<0.000000e+00> : vector<8x128xf32>
    %19 = tpu.matmul %17, %18, %cst_16 {dimension_numbers = #tpu.dot_dimension_numbers<[1], [0], [0], [1], [0, 0, 1, 1], [], []>} : vector<8x128xbf16>, vector<128x128xbf16>, vector<8x128xf32> -> vector<8x128xf32>
    %20 = vector.broadcast %3 : vector<1x128xf32> to vector<8x128xf32>
    %21 = arith.addf %19, %20 : vector<8x128xf32>
    %c0_17 = arith.constant 0 : index
    %c0_18 = arith.constant 0 : index
    %22 = vector.load %arg8[%c0_17, %c0_18] : memref<8x128xf32, #tpu.memory_space<vmem>>, vector<8x128xf32>
    tpu.vector_store %arg8[%c0_17, %c0_18], %21 {strides = array<i32>} : memref<8x128xf32, #tpu.memory_space<vmem>>, vector<8x128xf32>,
    return
  }
  func.func @transform_0(%arg0: i32) -> (i32, i32) {
    %c0_i32 = arith.constant 0 : i32
    %c0_i32_0 = arith.constant 0 : i32
    return %arg0, %c0_i32 : i32, i32
  }
  func.func @transform_1(%arg0: i32) -> (i32, i32) {
    %c0_i32 = arith.constant 0 : i32
    %c0_i32_0 = arith.constant 0 : i32
    %c0_i32_1 = arith.constant 0 : i32
    return %c0_i32, %c0_i32_0 : i32, i32
  }
  func.func @transform_2(%arg0: i32) -> (i32, i32) {
    %c0_i32 = arith.constant 0 : i32
    %c0_i32_0 = arith.constant 0 : i32
    %c0_i32_1 = arith.constant 0 : i32
    return %c0_i32, %c0_i32_0 : i32, i32
  }
  func.func @transform_3(%arg0: i32) -> (i32, i32) {
    %c0_i32 = arith.constant 0 : i32
    %c0_i32_0 = arith.constant 0 : i32
    %c0_i32_1 = arith.constant 0 : i32
    return %c0_i32, %c0_i32_0 : i32, i32
  }
  func.func @transform_4(%arg0: i32) -> (i32, i32) {
    %c0_i32 = arith.constant 0 : i32
    %c0_i32_0 = arith.constant 0 : i32
    %c0_i32_1 = arith.constant 0 : i32
    return %c0_i32, %c0_i32_0 : i32, i32
  }
  func.func @transform_5(%arg0: i32) -> (i32, i32) {
    %c0_i32 = arith.constant 0 : i32
    %c0_i32_0 = arith.constant 0 : i32
    %c0_i32_1 = arith.constant 0 : i32
    return %c0_i32, %c0_i32_0 : i32, i32
  }
  func.func @transform_6(%arg0: i32) -> (i32, i32) {
    %c0_i32 = arith.constant 0 : i32
    %c0_i32_0 = arith.constant 0 : i32
    %c0_i32_1 = arith.constant 0 : i32
    return %c0_i32, %c0_i32_0 : i32, i32
  }
  func.func @transform_7(%arg0: i32) -> (i32, i32) {
    %c0_i32 = arith.constant 0 : i32
    %c0_i32_0 = arith.constant 0 : i32
    return %arg0, %c0_i32 : i32, i32
  }
}

</mosaic_0001>

<llo_original>
// kernel: discriminator_simple_forward.1
$region0: #{discriminator_simple_forward.1}
  #allocation0 [shape = 'u32[]', space=smem, size = 0x4, offset = 0x4, fixed_abs, tag = 'smem constant byte address 0x4 - core index']
  #allocation1 [shape = 'u32[144,128]{1,0:T(1,128)}', space=vmem, size = 0x12000, scoped, tag = 'internal scratch']
  %s0 = inlined_call_operand.vmem [shape: bf16[8,1024], index: 0, kind: input, shape index: {}]
  %s1 = inlined_call_operand.hbm [shape: bf16[1024,128], index: 1, kind: input, shape index: {}]
  %s2 = inlined_call_operand.vmem [shape: f32[1,128], index: 2, kind: input, shape index: {}]
  %s3 = inlined_call_operand.vmem [shape: bf16[128,128], index: 3, kind: input, shape index: {}]
  %s4 = inlined_call_operand.vmem [shape: f32[1,128], index: 4, kind: input, shape index: {}]
  %s5 = inlined_call_operand.vmem [shape: bf16[128,128], index: 5, kind: input, shape index: {}]
  %s6 = inlined_call_operand.vmem [shape: f32[1,128], index: 6, kind: input, shape index: {}]
  %s7 = inlined_call_operand.vmem [shape: f32[8,128], index: 7, kind: output, shape index: {}]
  %s8 = sld [smem:[#allocation0]]
  $region42: #{discriminator_simple_forward.1} parent=0
    _
  %s10 = ssub.s32 1, %s8
  %s11 = scalar_select 0, %s10, %s8
  $region1: #{discriminator_simple_forward.1} parent=0
    #allocation2 [shape = 'u8[262144]{0}', space=vmem, size = 0x40000, scoped, tag = 'input window, operand 1, single buffered']
    #allocation3 [shape = 's32[1]{0}', space=sflag, size = 0x4, scoped, tag = 'scoped memory for discriminator_simple_forward.1']
    %12 = vsyncpa [#allocation3], 0
    // Predicated region
    $region2: #{discriminator_simple_forward.1} parent=1 // pred_check
      _
    $region3: #{discriminator_simple_forward.1} parent=1 // pred_check_branch
      %14 = sbr.rel (0) target = $region5
    $region4: #{discriminator_simple_forward.1} parent=1 // pred_region
      _
    $region5: #{discriminator_simple_forward.1} parent=1 // pred_fallthru
      _
    // Predicated region
    $region6: #{discriminator_simple_forward.1} parent=1 // pred_check
      _
    $region7: #{discriminator_simple_forward.1} parent=1 // pred_check_branch
      %16 = sbr.rel (0) target = $region9
    $region8: #{discriminator_simple_forward.1} parent=1 // pred_region
      %s18 = ssub.s32 8192, 8192
      %19 = vsyncadd [#allocation3], %s18
      %s20 = sshll.u32 [#allocation2], 4
      %s21 = int_to_ptr.vmem [resolvable:$true] %s20
      %26 = dma.hbm_to_vmem [thread:$0]  %s1, 8192, %s21, [#allocation3], 64, 64, 4
    $region9: #{discriminator_simple_forward.1} parent=1 // pred_fallthru
      _
    // Predicated region
    $region10: #{discriminator_simple_forward.1} parent=1 // pred_check
      _
    $region11: #{discriminator_simple_forward.1} parent=1 // pred_check_branch
      %28 = sbr.rel (0) target = $region13
    $region12: #{discriminator_simple_forward.1} parent=1 // pred_region
      _
    $region13: #{discriminator_simple_forward.1} parent=1 // pred_fallthru
      _
    // Predicated region
    $region14: #{discriminator_simple_forward.1} parent=1 // pred_check
      _
    $region15: #{discriminator_simple_forward.1} parent=1 // pred_check_branch
      %30 = sbr.rel (0) target = $region17
    $region16: #{discriminator_simple_forward.1} parent=1 // pred_region
      _
    $region17: #{discriminator_simple_forward.1} parent=1 // pred_fallthru
      _
    // Predicated region
    $region18: #{discriminator_simple_forward.1} parent=1 // pred_check
      _
    $region19: #{discriminator_simple_forward.1} parent=1 // pred_check_branch
      %32 = sbr.rel (0) target = $region21
    $region20: #{discriminator_simple_forward.1} parent=1 // pred_region
      _
    $region21: #{discriminator_simple_forward.1} parent=1 // pred_fallthru
      _
    // Predicated region
    $region22: #{discriminator_simple_forward.1} parent=1 // pred_check
      _
    $region23: #{discriminator_simple_forward.1} parent=1 // pred_check_branch
      %34 = sbr.rel (0) target = $region25
    $region24: #{discriminator_simple_forward.1} parent=1 // pred_region
      _
    $region25: #{discriminator_simple_forward.1} parent=1 // pred_fallthru
      _
    // Predicated region
    $region26: #{discriminator_simple_forward.1} parent=1 // pred_check
      _
    $region27: #{discriminator_simple_forward.1} parent=1 // pred_check_branch
      %36 = sbr.rel (0) target = $region29
    $region28: #{discriminator_simple_forward.1} parent=1 // pred_region
      _
    $region29: #{discriminator_simple_forward.1} parent=1 // pred_fallthru
      _
    // Predicated region
    $region30: #{discriminator_simple_forward.1} parent=1 // pred_check
      _
    $region31: #{discriminator_simple_forward.1} parent=1 // pred_check_branch
      %38 = sbr.rel (0) target = $region33
    $region32: #{discriminator_simple_forward.1} parent=1 // pred_region
      %39 = dma.done [#allocation3], 8192
    $region33: #{discriminator_simple_forward.1} parent=1 // pred_fallthru
      _
    %v41 = vld [vmem:[%s0] sm:$0xff]
    %v42 = vld [vmem:[%s0 + $0x8] sm:$0xff]
    %v43 = vld [vmem:[%s0 + $0x10] sm:$0xff]
    %v44 = vld [vmem:[%s0 + $0x18] sm:$0xff]
    %v45 = vld [vmem:[%s2] sm:$0x1]
    %v46 = vld [vmem:[%s4] sm:$0x1]
    %v47 = vld [vmem:[%s6] sm:$0x1]
    %v48 = vld [vmem:[#allocation2] sm:$0xf]
    %v49 = vld [vmem:[#allocation2 + $0x4] sm:$0xf]
    %v50 = vld [vmem:[#allocation2 + $0x8] sm:$0xf]
    %v51 = vld [vmem:[#allocation2 + $0xc] sm:$0xf]
    %v52 = vld [vmem:[#allocation2 + $0x10] sm:$0xf]
    %v53 = vld [vmem:[#allocation2 + $0x14] sm:$0xf]
    %v54 = vld [vmem:[#allocation2 + $0x18] sm:$0xf]
    %v55 = vld [vmem:[#allocation2 + $0x1c] sm:$0xf]
    %v56 = vld [vmem:[#allocation2 + $0x20] sm:$0xf]
    %v57 = vld [vmem:[#allocation2 + $0x24] sm:$0xf]
    %v58 = vld [vmem:[#allocation2 + $0x28] sm:$0xf]
    %v59 = vld [vmem:[#allocation2 + $0x2c] sm:$0xf]
    %v60 = vld [vmem:[#allocation2 + $0x30] sm:$0xf]
    %v61 = vld [vmem:[#allocation2 + $0x34] sm:$0xf]
    %v62 = vld [vmem:[#allocation2 + $0x38] sm:$0xf]
    %v63 = vld [vmem:[#allocation2 + $0x3c] sm:$0xf]
    %v64 = vld [vmem:[#allocation2 + $0x40] sm:$0xf]
    %v65 = vld [vmem:[#allocation2 + $0x44] sm:$0xf]
    %v66 = vld [vmem:[#allocation2 + $0x48] sm:$0xf]
    %v67 = vld [vmem:[#allocation2 + $0x4c] sm:$0xf]
    %v68 = vld [vmem:[#allocation2 + $0x50] sm:$0xf]
    %v69 = vld [vmem:[#allocation2 + $0x54] sm:$0xf]
    %v70 = vld [vmem:[#allocation2 + $0x58] sm:$0xf]
    %v71 = vld [vmem:[#allocation2 + $0x5c] sm:$0xf]
    %v72 = vld [vmem:[#allocation2 + $0x60] sm:$0xf]
    %v73 = vld [vmem:[#allocation2 + $0x64] sm:$0xf]
    %v74 = vld [vmem:[#allocation2 + $0x68] sm:$0xf]
    %v75 = vld [vmem:[#allocation2 + $0x6c] sm:$0xf]
    %v76 = vld [vmem:[#allocation2 + $0x70] sm:$0xf]
    %v77 = vld [vmem:[#allocation2 + $0x74] sm:$0xf]
    %v78 = vld [vmem:[#allocation2 + $0x78] sm:$0xf]
    %v79 = vld [vmem:[#allocation2 + $0x7c] sm:$0xf]
    %v80 = vld [vmem:[#allocation2 + $0x80] sm:$0xf]
    %v81 = vld [vmem:[#allocation2 + $0x84] sm:$0xf]
    %v82 = vld [vmem:[#allocation2 + $0x88] sm:$0xf]
    %v83 = vld [vmem:[#allocation2 + $0x8c] sm:$0xf]
    %v84 = vld [vmem:[#allocation2 + $0x90] sm:$0xf]
    %v85 = vld [vmem:[#allocation2 + $0x94] sm:$0xf]
    %v86 = vld [vmem:[#allocation2 + $0x98] sm:$0xf]
    %v87 = vld [vmem:[#allocation2 + $0x9c] sm:$0xf]
    %v88 = vld [vmem:[#allocation2 + $0xa0] sm:$0xf]
    %v89 = vld [vmem:[#allocation2 + $0xa4] sm:$0xf]
    %v90 = vld [vmem:[#allocation2 + $0xa8] sm:$0xf]
    %v91 = vld [vmem:[#allocation2 + $0xac] sm:$0xf]
    %v92 = vld [vmem:[#allocation2 + $0xb0] sm:$0xf]
    %v93 = vld [vmem:[#allocation2 + $0xb4] sm:$0xf]
    %v94 = vld [vmem:[#allocation2 + $0xb8] sm:$0xf]
    %v95 = vld [vmem:[#allocation2 + $0xbc] sm:$0xf]
    %v96 = vld [vmem:[#allocation2 + $0xc0] sm:$0xf]
    %v97 = vld [vmem:[#allocation2 + $0xc4] sm:$0xf]
    %v98 = vld [vmem:[#allocation2 + $0xc8] sm:$0xf]
    %v99 = vld [vmem:[#allocation2 + $0xcc] sm:$0xf]
    %v100 = vld [vmem:[#allocation2 + $0xd0] sm:$0xf]
    %v101 = vld [vmem:[#allocation2 + $0xd4] sm:$0xf]
    %v102 = vld [vmem:[#allocation2 + $0xd8] sm:$0xf]
    %v103 = vld [vmem:[#allocation2 + $0xdc] sm:$0xf]
    %v104 = vld [vmem:[#allocation2 + $0xe0] sm:$0xf]
    %v105 = vld [vmem:[#allocation2 + $0xe4] sm:$0xf]
    %v106 = vld [vmem:[#allocation2 + $0xe8] sm:$0xf]
    %v107 = vld [vmem:[#allocation2 + $0xec] sm:$0xf]
    %v108 = vld [vmem:[#allocation2 + $0xf0] sm:$0xf]
    %v109 = vld [vmem:[#allocation2 + $0xf4] sm:$0xf]
    %v110 = vld [vmem:[#allocation2 + $0xf8] sm:$0xf]
    %v111 = vld [vmem:[#allocation2 + $0xfc] sm:$0xf]
    %v112 = vld [vmem:[#allocation2 + $0x100] sm:$0xf]
    %v113 = vld [vmem:[#allocation2 + $0x104] sm:$0xf]
    %v114 = vld [vmem:[#allocation2 + $0x108] sm:$0xf]
    %v115 = vld [vmem:[#allocation2 + $0x10c] sm:$0xf]
    %v116 = vld [vmem:[#allocation2 + $0x110] sm:$0xf]
    %v117 = vld [vmem:[#allocation2 + $0x114] sm:$0xf]
    %v118 = vld [vmem:[#allocation2 + $0x118] sm:$0xf]
    %v119 = vld [vmem:[#allocation2 + $0x11c] sm:$0xf]
    %v120 = vld [vmem:[#allocation2 + $0x120] sm:$0xf]
    %v121 = vld [vmem:[#allocation2 + $0x124] sm:$0xf]
    %v122 = vld [vmem:[#allocation2 + $0x128] sm:$0xf]
    %v123 = vld [vmem:[#allocation2 + $0x12c] sm:$0xf]
    %v124 = vld [vmem:[#allocation2 + $0x130] sm:$0xf]
    %v125 = vld [vmem:[#allocation2 + $0x134] sm:$0xf]
    %v126 = vld [vmem:[#allocation2 + $0x138] sm:$0xf]
    %v127 = vld [vmem:[#allocation2 + $0x13c] sm:$0xf]
    %v128 = vld [vmem:[#allocation2 + $0x140] sm:$0xf]
    %v129 = vld [vmem:[#allocation2 + $0x144] sm:$0xf]
    %v130 = vld [vmem:[#allocation2 + $0x148] sm:$0xf]
    %v131 = vld [vmem:[#allocation2 + $0x14c] sm:$0xf]
    %v132 = vld [vmem:[#allocation2 + $0x150] sm:$0xf]
    %v133 = vld [vmem:[#allocation2 + $0x154] sm:$0xf]
    %v134 = vld [vmem:[#allocation2 + $0x158] sm:$0xf]
    %v135 = vld [vmem:[#allocation2 + $0x15c] sm:$0xf]
    %v136 = vld [vmem:[#allocation2 + $0x160] sm:$0xf]
    %v137 = vld [vmem:[#allocation2 + $0x164] sm:$0xf]
    %v138 = vld [vmem:[#allocation2 + $0x168] sm:$0xf]
    %v139 = vld [vmem:[#allocation2 + $0x16c] sm:$0xf]
    %v140 = vld [vmem:[#allocation2 + $0x170] sm:$0xf]
    %v141 = vld [vmem:[#allocation2 + $0x174] sm:$0xf]
    %v142 = vld [vmem:[#allocation2 + $0x178] sm:$0xf]
    %v143 = vld [vmem:[#allocation2 + $0x17c] sm:$0xf]
    %v144 = vld [vmem:[#allocation2 + $0x180] sm:$0xf]
    %v145 = vld [vmem:[#allocation2 + $0x184] sm:$0xf]
    %v146 = vld [vmem:[#allocation2 + $0x188] sm:$0xf]
    %v147 = vld [vmem:[#allocation2 + $0x18c] sm:$0xf]
    %v148 = vld [vmem:[#allocation2 + $0x190] sm:$0xf]
    %v149 = vld [vmem:[#allocation2 + $0x194] sm:$0xf]
    %v150 = vld [vmem:[#allocation2 + $0x198] sm:$0xf]
    %v151 = vld [vmem:[#allocation2 + $0x19c] sm:$0xf]
    %v152 = vld [vmem:[#allocation2 + $0x1a0] sm:$0xf]
    %v153 = vld [vmem:[#allocation2 + $0x1a4] sm:$0xf]
    %v154 = vld [vmem:[#allocation2 + $0x1a8] sm:$0xf]
    %v155 = vld [vmem:[#allocation2 + $0x1ac] sm:$0xf]
    %v156 = vld [vmem:[#allocation2 + $0x1b0] sm:$0xf]
    %v157 = vld [vmem:[#allocation2 + $0x1b4] sm:$0xf]
    %v158 = vld [vmem:[#allocation2 + $0x1b8] sm:$0xf]
    %v159 = vld [vmem:[#allocation2 + $0x1bc] sm:$0xf]
    %v160 = vld [vmem:[#allocation2 + $0x1c0] sm:$0xf]
    %v161 = vld [vmem:[#allocation2 + $0x1c4] sm:$0xf]
    %v162 = vld [vmem:[#allocation2 + $0x1c8] sm:$0xf]
    %v163 = vld [vmem:[#allocation2 + $0x1cc] sm:$0xf]
    %v164 = vld [vmem:[#allocation2 + $0x1d0] sm:$0xf]
    %v165 = vld [vmem:[#allocation2 + $0x1d4] sm:$0xf]
    %v166 = vld [vmem:[#allocation2 + $0x1d8] sm:$0xf]
    %v167 = vld [vmem:[#allocation2 + $0x1dc] sm:$0xf]
    %v168 = vld [vmem:[#allocation2 + $0x1e0] sm:$0xf]
    %v169 = vld [vmem:[#allocation2 + $0x1e4] sm:$0xf]
    %v170 = vld [vmem:[#allocation2 + $0x1e8] sm:$0xf]
    %v171 = vld [vmem:[#allocation2 + $0x1ec] sm:$0xf]
    %v172 = vld [vmem:[#allocation2 + $0x1f0] sm:$0xf]
    %v173 = vld [vmem:[#allocation2 + $0x1f4] sm:$0xf]
    %v174 = vld [vmem:[#allocation2 + $0x1f8] sm:$0xf]
    %v175 = vld [vmem:[#allocation2 + $0x1fc] sm:$0xf]
    %v177 = vlaneseq
    %v178 = vshrl.u32 %v177, 7
    %v179 = vsub.s32 0, %v178
    %v180 = vrot.slane %v45, %v179
    %v186 = vunpack.c.l.b16 %v41
    %v187 = vunpack.c.h.b16 %v41
    %v188 = vunpack.c.l.b16 %v42
    %v189 = vunpack.c.h.b16 %v42
    %v190 = vunpack.c.l.b16 %v43
    %v191 = vunpack.c.h.b16 %v43
    %v192 = vunpack.c.l.b16 %v44
    %v193 = vunpack.c.h.b16 %v44
    %v194 = vpack.c.b16 %v186, %v186
    %v195 = vpack.c.b16 %v187, %v187
    %v196 = vpack.c.b16 %v188, %v188
    %v197 = vpack.c.b16 %v189, %v189
    %v198 = vpack.c.b16 %v190, %v190
    %v199 = vpack.c.b16 %v191, %v191
    %v200 = vpack.c.b16 %v192, %v192
    %v201 = vpack.c.b16 %v193, %v193
    %v338 = vunpack.c.l.b16 %v48
    %v339 = vunpack.c.l.b16 %v49
    %v340 = vunpack.c.l.b16 %v50
    %v341 = vunpack.c.l.b16 %v51
    %v342 = vunpack.c.l.b16 %v52
    %v343 = vunpack.c.l.b16 %v53
    %v344 = vunpack.c.l.b16 %v54
    %v345 = vunpack.c.l.b16 %v55
    %v346 = vunpack.c.l.b16 %v56
    %v347 = vunpack.c.l.b16 %v57
    %v348 = vunpack.c.l.b16 %v58
    %v349 = vunpack.c.l.b16 %v59
    %v350 = vunpack.c.l.b16 %v60
    %v351 = vunpack.c.l.b16 %v61
    %v352 = vunpack.c.l.b16 %v62
    %v353 = vunpack.c.l.b16 %v63
    %v354 = vunpack.c.l.b16 %v64
    %v355 = vunpack.c.l.b16 %v65
    %v356 = vunpack.c.l.b16 %v66
    %v357 = vunpack.c.l.b16 %v67
    %v358 = vunpack.c.l.b16 %v68
    %v359 = vunpack.c.l.b16 %v69
    %v360 = vunpack.c.l.b16 %v70
    %v361 = vunpack.c.l.b16 %v71
    %v362 = vunpack.c.l.b16 %v72
    %v363 = vunpack.c.l.b16 %v73
    %v364 = vunpack.c.l.b16 %v74
    %v365 = vunpack.c.l.b16 %v75
    %v366 = vunpack.c.l.b16 %v76
    %v367 = vunpack.c.l.b16 %v77
    %v368 = vunpack.c.l.b16 %v78
    %v369 = vunpack.c.l.b16 %v79
    %v370 = vunpack.c.l.b16 %v80
    %v371 = vunpack.c.l.b16 %v81
    %v372 = vunpack.c.l.b16 %v82
    %v373 = vunpack.c.l.b16 %v83
    %v374 = vunpack.c.l.b16 %v84
    %v375 = vunpack.c.l.b16 %v85
    %v376 = vunpack.c.l.b16 %v86
    %v377 = vunpack.c.l.b16 %v87
    %v378 = vunpack.c.l.b16 %v88
    %v379 = vunpack.c.l.b16 %v89
    %v380 = vunpack.c.l.b16 %v90
    %v381 = vunpack.c.l.b16 %v91
    %v382 = vunpack.c.l.b16 %v92
    %v383 = vunpack.c.l.b16 %v93
    %v384 = vunpack.c.l.b16 %v94
    %v385 = vunpack.c.l.b16 %v95
    %v386 = vunpack.c.l.b16 %v96
    %v387 = vunpack.c.l.b16 %v97
    %v388 = vunpack.c.l.b16 %v98
    %v389 = vunpack.c.l.b16 %v99
    %v390 = vunpack.c.l.b16 %v100
    %v391 = vunpack.c.l.b16 %v101
    %v392 = vunpack.c.l.b16 %v102
    %v393 = vunpack.c.l.b16 %v103
    %v394 = vunpack.c.l.b16 %v104
    %v395 = vunpack.c.l.b16 %v105
    %v396 = vunpack.c.l.b16 %v106
    %v397 = vunpack.c.l.b16 %v107
    %v398 = vunpack.c.l.b16 %v108
    %v399 = vunpack.c.l.b16 %v109
    %v400 = vunpack.c.l.b16 %v110
    %v401 = vunpack.c.l.b16 %v111
    %v402 = vunpack.c.l.b16 %v112
    %v403 = vunpack.c.l.b16 %v113
    %v404 = vunpack.c.l.b16 %v114
    %v405 = vunpack.c.l.b16 %v115
    %v406 = vunpack.c.l.b16 %v116
    %v407 = vunpack.c.l.b16 %v117
    %v408 = vunpack.c.l.b16 %v118
    %v409 = vunpack.c.l.b16 %v119
    %v410 = vunpack.c.l.b16 %v120
    %v411 = vunpack.c.l.b16 %v121
    %v412 = vunpack.c.l.b16 %v122
    %v413 = vunpack.c.l.b16 %v123
    %v414 = vunpack.c.l.b16 %v124
    %v415 = vunpack.c.l.b16 %v125
    %v416 = vunpack.c.l.b16 %v126
    %v417 = vunpack.c.l.b16 %v127
    %v418 = vunpack.c.l.b16 %v128
    %v419 = vunpack.c.l.b16 %v129
    %v420 = vunpack.c.l.b16 %v130
    %v421 = vunpack.c.l.b16 %v131
    %v422 = vunpack.c.l.b16 %v132
    %v423 = vunpack.c.l.b16 %v133
    %v424 = vunpack.c.l.b16 %v134
    %v425 = vunpack.c.l.b16 %v135
    %v426 = vunpack.c.l.b16 %v136
    %v427 = vunpack.c.l.b16 %v137
    %v428 = vunpack.c.l.b16 %v138
    %v429 = vunpack.c.l.b16 %v139
    %v430 = vunpack.c.l.b16 %v140
    %v431 = vunpack.c.l.b16 %v141
    %v432 = vunpack.c.l.b16 %v142
    %v433 = vunpack.c.l.b16 %v143
    %v434 = vunpack.c.l.b16 %v144
    %v435 = vunpack.c.l.b16 %v145
    %v436 = vunpack.c.l.b16 %v146
    %v437 = vunpack.c.l.b16 %v147
    %v438 = vunpack.c.l.b16 %v148
    %v439 = vunpack.c.l.b16 %v149
    %v440 = vunpack.c.l.b16 %v150
    %v441 = vunpack.c.l.b16 %v151
    %v442 = vunpack.c.l.b16 %v152
    %v443 = vunpack.c.l.b16 %v153
    %v444 = vunpack.c.l.b16 %v154
    %v445 = vunpack.c.l.b16 %v155
    %v446 = vunpack.c.l.b16 %v156
    %v447 = vunpack.c.l.b16 %v157
    %v448 = vunpack.c.l.b16 %v158
    %v449 = vunpack.c.l.b16 %v159
    %v450 = vunpack.c.l.b16 %v160
    %v451 = vunpack.c.l.b16 %v161
    %v452 = vunpack.c.l.b16 %v162
    %v453 = vunpack.c.l.b16 %v163
    %v454 = vunpack.c.l.b16 %v164
    %v455 = vunpack.c.l.b16 %v165
    %v456 = vunpack.c.l.b16 %v166
    %v457 = vunpack.c.l.b16 %v167
    %v458 = vunpack.c.l.b16 %v168
    %v459 = vunpack.c.l.b16 %v169
    %v460 = vunpack.c.l.b16 %v170
    %v461 = vunpack.c.l.b16 %v171
    %v462 = vunpack.c.l.b16 %v172
    %v463 = vunpack.c.l.b16 %v173
    %v464 = vunpack.c.l.b16 %v174
    %v465 = vunpack.c.l.b16 %v175
    %v466 = vpack.c.b16 %v339, %v338
    %v467 = vpack.c.b16 %v341, %v340
    %v468 = vpack.c.b16 %v343, %v342
    %v469 = vpack.c.b16 %v345, %v344
    %v470 = vpack.c.b16 %v347, %v346
    %v471 = vpack.c.b16 %v349, %v348
    %v472 = vpack.c.b16 %v351, %v350
    %v473 = vpack.c.b16 %v353, %v352
    %v474 = vpack.c.b16 %v355, %v354
    %v475 = vpack.c.b16 %v357, %v356
    %v476 = vpack.c.b16 %v359, %v358
    %v477 = vpack.c.b16 %v361, %v360
    %v478 = vpack.c.b16 %v363, %v362
    %v479 = vpack.c.b16 %v365, %v364
    %v480 = vpack.c.b16 %v367, %v366
    %v481 = vpack.c.b16 %v369, %v368
    %v482 = vpack.c.b16 %v371, %v370
    %v483 = vpack.c.b16 %v373, %v372
    %v484 = vpack.c.b16 %v375, %v374
    %v485 = vpack.c.b16 %v377, %v376
    %v486 = vpack.c.b16 %v379, %v378
    %v487 = vpack.c.b16 %v381, %v380
    %v488 = vpack.c.b16 %v383, %v382
    %v489 = vpack.c.b16 %v385, %v384
    %v490 = vpack.c.b16 %v387, %v386
    %v491 = vpack.c.b16 %v389, %v388
    %v492 = vpack.c.b16 %v391, %v390
    %v493 = vpack.c.b16 %v393, %v392
    %v494 = vpack.c.b16 %v395, %v394
    %v495 = vpack.c.b16 %v397, %v396
    %v496 = vpack.c.b16 %v399, %v398
    %v497 = vpack.c.b16 %v401, %v400
    %v498 = vpack.c.b16 %v403, %v402
    %v499 = vpack.c.b16 %v405, %v404
    %v500 = vpack.c.b16 %v407, %v406
    %v501 = vpack.c.b16 %v409, %v408
    %v502 = vpack.c.b16 %v411, %v410
    %v503 = vpack.c.b16 %v413, %v412
    %v504 = vpack.c.b16 %v415, %v414
    %v505 = vpack.c.b16 %v417, %v416
    %v506 = vpack.c.b16 %v419, %v418
    %v507 = vpack.c.b16 %v421, %v420
    %v508 = vpack.c.b16 %v423, %v422
    %v509 = vpack.c.b16 %v425, %v424
    %v510 = vpack.c.b16 %v427, %v426
    %v511 = vpack.c.b16 %v429, %v428
    %v512 = vpack.c.b16 %v431, %v430
    %v513 = vpack.c.b16 %v433, %v432
    %v514 = vpack.c.b16 %v435, %v434
    %v515 = vpack.c.b16 %v437, %v436
    %v516 = vpack.c.b16 %v439, %v438
    %v517 = vpack.c.b16 %v441, %v440
    %v518 = vpack.c.b16 %v443, %v442
    %v519 = vpack.c.b16 %v445, %v444
    %v520 = vpack.c.b16 %v447, %v446
    %v521 = vpack.c.b16 %v449, %v448
    %v522 = vpack.c.b16 %v451, %v450
    %v523 = vpack.c.b16 %v453, %v452
    %v524 = vpack.c.b16 %v455, %v454
    %v525 = vpack.c.b16 %v457, %v456
    %v526 = vpack.c.b16 %v459, %v458
    %v527 = vpack.c.b16 %v461, %v460
    %v528 = vpack.c.b16 %v463, %v462
    %v529 = vpack.c.b16 %v465, %v464
    %594 = vmatprep.subr.bf16.mxu0 0
    %595 = vmatpush1.bf16.msra.mxu0 %v466
    %596 = vmatprep.subr.bf16.mxu0 0
    %597 = vmatpush1.bf16.msra.mxu0 %v467
    %598 = vmatprep.subr.bf16.mxu0 0
    %599 = vmatpush1.bf16.msra.mxu0 %v468
    %600 = vmatprep.subr.bf16.mxu0 0
    %601 = vmatpush1.bf16.msra.mxu0 %v469
    %602 = vmatprep.subr.bf16.mxu0 0
    %603 = vmatpush1.bf16.msra.mxu0 %v470
    %604 = vmatprep.subr.bf16.mxu0 0
    %605 = vmatpush1.bf16.msra.mxu0 %v471
    %606 = vmatprep.subr.bf16.mxu0 0
    %607 = vmatpush1.bf16.msra.mxu0 %v472
    %608 = vmatprep.subr.bf16.mxu0 0
    %609 = vmatpush1.bf16.msra.mxu0 %v473
    %610 = vmatprep.subr.bf16.mxu0 0
    %611 = vmatpush1.bf16.msra.mxu0 %v474
    %612 = vmatprep.subr.bf16.mxu0 0
    %613 = vmatpush1.bf16.msra.mxu0 %v475
    %614 = vmatprep.subr.bf16.mxu0 0
    %615 = vmatpush1.bf16.msra.mxu0 %v476
    %616 = vmatprep.subr.bf16.mxu0 0
    %617 = vmatpush1.bf16.msra.mxu0 %v477
    %618 = vmatprep.subr.bf16.mxu0 0
    %619 = vmatpush1.bf16.msra.mxu0 %v478
    %620 = vmatprep.subr.bf16.mxu0 0
    %621 = vmatpush1.bf16.msra.mxu0 %v479
    %622 = vmatprep.subr.bf16.mxu0 0
    %623 = vmatpush1.bf16.msra.mxu0 %v480
    %624 = vmatprep.subr.bf16.mxu0 0
    %625 = vmatpush1.bf16.msra.mxu0 %v481
    %626 = vmatprep.mubr.bf16.mxu0 %v195
    %627 = vmatmul.mubr.bf16.gmra.mrb[0].mxu0 %v194
    %v628 = vpop.f32.mrb[0].mxu0
    %v629 = vadd.f32 %v180, %v628
    %v630 = vpop.f32.mrb[0].mxu0
    %v631 = vpop.f32.mrb[0].mxu0
    %v632 = vpop.f32.mrb[0].mxu0
    %633 = vdwg.mxu0
    %634 = vmatprep.subr.bf16.mxu0 0
    %635 = vmatpush1.bf16.msra.mxu0 %v482
    %636 = vmatprep.subr.bf16.mxu0 0
    %637 = vmatpush1.bf16.msra.mxu0 %v483
    %638 = vmatprep.subr.bf16.mxu0 0
    %639 = vmatpush1.bf16.msra.mxu0 %v484
    %640 = vmatprep.subr.bf16.mxu0 0
    %641 = vmatpush1.bf16.msra.mxu0 %v485
    %642 = vmatprep.subr.bf16.mxu0 0
    %643 = vmatpush1.bf16.msra.mxu0 %v486
    %644 = vmatprep.subr.bf16.mxu0 0
    %645 = vmatpush1.bf16.msra.mxu0 %v487
    %646 = vmatprep.subr.bf16.mxu0 0
    %647 = vmatpush1.bf16.msra.mxu0 %v488
    %648 = vmatprep.subr.bf16.mxu0 0
    %649 = vmatpush1.bf16.msra.mxu0 %v489
    %650 = vmatprep.subr.bf16.mxu0 0
    %651 = vmatpush1.bf16.msra.mxu0 %v490
    %652 = vmatprep.subr.bf16.mxu0 0
    %653 = vmatpush1.bf16.msra.mxu0 %v491
    %654 = vmatprep.subr.bf16.mxu0 0
    %655 = vmatpush1.bf16.msra.mxu0 %v492
    %656 = vmatprep.subr.bf16.mxu0 0
    %657 = vmatpush1.bf16.msra.mxu0 %v493
    %658 = vmatprep.subr.bf16.mxu0 0
    %659 = vmatpush1.bf16.msra.mxu0 %v494
    %660 = vmatprep.subr.bf16.mxu0 0
    %661 = vmatpush1.bf16.msra.mxu0 %v495
    %662 = vmatprep.subr.bf16.mxu0 0
    %663 = vmatpush1.bf16.msra.mxu0 %v496
    %664 = vmatprep.subr.bf16.mxu0 0
    %665 = vmatpush1.bf16.msra.mxu0 %v497
    %666 = vmatprep.mubr.bf16.mxu0 %v197
    %667 = vmatmul.mubr.bf16.gmra.mrb[0].mxu0 %v196
    %v668 = vpop.f32.mrb[0].mxu0
    %v669 = vadd.f32 %v629, %v668
    %v670 = vpop.f32.mrb[0].mxu0
    %v671 = vpop.f32.mrb[0].mxu0
    %v672 = vpop.f32.mrb[0].mxu0
    %673 = vdwg.mxu0
    %674 = vmatprep.subr.bf16.mxu0 0
    %675 = vmatpush1.bf16.msra.mxu0 %v498
    %676 = vmatprep.subr.bf16.mxu0 0
    %677 = vmatpush1.bf16.msra.mxu0 %v499
    %678 = vmatprep.subr.bf16.mxu0 0
    %679 = vmatpush1.bf16.msra.mxu0 %v500
    %680 = vmatprep.subr.bf16.mxu0 0
    %681 = vmatpush1.bf16.msra.mxu0 %v501
    %682 = vmatprep.subr.bf16.mxu0 0
    %683 = vmatpush1.bf16.msra.mxu0 %v502
    %684 = vmatprep.subr.bf16.mxu0 0
    %685 = vmatpush1.bf16.msra.mxu0 %v503
    %686 = vmatprep.subr.bf16.mxu0 0
    %687 = vmatpush1.bf16.msra.mxu0 %v504
    %688 = vmatprep.subr.bf16.mxu0 0
    %689 = vmatpush1.bf16.msra.mxu0 %v505
    %690 = vmatprep.subr.bf16.mxu0 0
    %691 = vmatpush1.bf16.msra.mxu0 %v506
    %692 = vmatprep.subr.bf16.mxu0 0
    %693 = vmatpush1.bf16.msra.mxu0 %v507
    %694 = vmatprep.subr.bf16.mxu0 0
    %695 = vmatpush1.bf16.msra.mxu0 %v508
    %696 = vmatprep.subr.bf16.mxu0 0
    %697 = vmatpush1.bf16.msra.mxu0 %v509
    %698 = vmatprep.subr.bf16.mxu0 0
    %699 = vmatpush1.bf16.msra.mxu0 %v510
    %700 = vmatprep.subr.bf16.mxu0 0
    %701 = vmatpush1.bf16.msra.mxu0 %v511
    %702 = vmatprep.subr.bf16.mxu0 0
    %703 = vmatpush1.bf16.msra.mxu0 %v512
    %704 = vmatprep.subr.bf16.mxu0 0
    %705 = vmatpush1.bf16.msra.mxu0 %v513
    %706 = vmatprep.mubr.bf16.mxu0 %v199
    %707 = vmatmul.mubr.bf16.gmra.mrb[0].mxu0 %v198
    %v708 = vpop.f32.mrb[0].mxu0
    %v709 = vadd.f32 %v669, %v708
    %v710 = vpop.f32.mrb[0].mxu0
    %v711 = vpop.f32.mrb[0].mxu0
    %v712 = vpop.f32.mrb[0].mxu0
    %713 = vdwg.mxu0
    %714 = vmatprep.subr.bf16.mxu0 0
    %715 = vmatpush1.bf16.msra.mxu0 %v514
    %716 = vmatprep.subr.bf16.mxu0 0
    %717 = vmatpush1.bf16.msra.mxu0 %v515
    %718 = vmatprep.subr.bf16.mxu0 0
    %719 = vmatpush1.bf16.msra.mxu0 %v516
    %720 = vmatprep.subr.bf16.mxu0 0
    %721 = vmatpush1.bf16.msra.mxu0 %v517
    %722 = vmatprep.subr.bf16.mxu0 0
    %723 = vmatpush1.bf16.msra.mxu0 %v518
    %724 = vmatprep.subr.bf16.mxu0 0
    %725 = vmatpush1.bf16.msra.mxu0 %v519
    %726 = vmatprep.subr.bf16.mxu0 0
    %727 = vmatpush1.bf16.msra.mxu0 %v520
    %728 = vmatprep.subr.bf16.mxu0 0
    %729 = vmatpush1.bf16.msra.mxu0 %v521
    %730 = vmatprep.subr.bf16.mxu0 0
    %731 = vmatpush1.bf16.msra.mxu0 %v522
    %732 = vmatprep.subr.bf16.mxu0 0
    %733 = vmatpush1.bf16.msra.mxu0 %v523
    %734 = vmatprep.subr.bf16.mxu0 0
    %735 = vmatpush1.bf16.msra.mxu0 %v524
    %736 = vmatprep.subr.bf16.mxu0 0
    %737 = vmatpush1.bf16.msra.mxu0 %v525
    %738 = vmatprep.subr.bf16.mxu0 0
    %739 = vmatpush1.bf16.msra.mxu0 %v526
    %740 = vmatprep.subr.bf16.mxu0 0
    %741 = vmatpush1.bf16.msra.mxu0 %v527
    %742 = vmatprep.subr.bf16.mxu0 0
    %743 = vmatpush1.bf16.msra.mxu0 %v528
    %744 = vmatprep.subr.bf16.mxu0 0
    %745 = vmatpush1.bf16.msra.mxu0 %v529
    %746 = vmatprep.mubr.bf16.mxu0 %v201
    %747 = vmatmul.mubr.bf16.gmra.mrb[0].mxu0 %v200
    %v748 = vpop.f32.mrb[0].mxu0
    %v749 = vadd.f32 %v709, %v748
    %v750 = vpop.f32.mrb[0].mxu0
    %v751 = vpop.f32.mrb[0].mxu0
    %v752 = vpop.f32.mrb[0].mxu0
    %753 = vdwg.mxu0
    %v754 = vmax.f32 %v749, 0.0
    %v755 = vpack.c.bf16 %v754, %v754
    %v756 = vld [vmem:[%s3] sm:$0xf]
    %v757 = vld [vmem:[%s3 + $0x4] sm:$0xf]
    %v758 = vld [vmem:[%s3 + $0x8] sm:$0xf]
    %v759 = vld [vmem:[%s3 + $0xc] sm:$0xf]
    %v760 = vld [vmem:[%s3 + $0x10] sm:$0xf]
    %v761 = vld [vmem:[%s3 + $0x14] sm:$0xf]
    %v762 = vld [vmem:[%s3 + $0x18] sm:$0xf]
    %v763 = vld [vmem:[%s3 + $0x1c] sm:$0xf]
    %v764 = vld [vmem:[%s3 + $0x20] sm:$0xf]
    %v765 = vld [vmem:[%s3 + $0x24] sm:$0xf]
    %v766 = vld [vmem:[%s3 + $0x28] sm:$0xf]
    %v767 = vld [vmem:[%s3 + $0x2c] sm:$0xf]
    %v768 = vld [vmem:[%s3 + $0x30] sm:$0xf]
    %v769 = vld [vmem:[%s3 + $0x34] sm:$0xf]
    %v770 = vld [vmem:[%s3 + $0x38] sm:$0xf]
    %v771 = vld [vmem:[%s3 + $0x3c] sm:$0xf]
    %v773 = vlaneseq
    %v774 = vshrl.u32 %v773, 7
    %v775 = vsub.s32 0, %v774
    %v776 = vrot.slane %v46, %v775
    %v794 = vunpack.c.l.b16 %v756
    %v795 = vunpack.c.l.b16 %v757
    %v796 = vunpack.c.l.b16 %v758
    %v797 = vunpack.c.l.b16 %v759
    %v798 = vunpack.c.l.b16 %v760
    %v799 = vunpack.c.l.b16 %v761
    %v800 = vunpack.c.l.b16 %v762
    %v801 = vunpack.c.l.b16 %v763
    %v802 = vunpack.c.l.b16 %v764
    %v803 = vunpack.c.l.b16 %v765
    %v804 = vunpack.c.l.b16 %v766
    %v805 = vunpack.c.l.b16 %v767
    %v806 = vunpack.c.l.b16 %v768
    %v807 = vunpack.c.l.b16 %v769
    %v808 = vunpack.c.l.b16 %v770
    %v809 = vunpack.c.l.b16 %v771
    %v810 = vpack.c.b16 %v795, %v794
    %v811 = vpack.c.b16 %v797, %v796
    %v812 = vpack.c.b16 %v799, %v798
    %v813 = vpack.c.b16 %v801, %v800
    %v814 = vpack.c.b16 %v803, %v802
    %v815 = vpack.c.b16 %v805, %v804
    %v816 = vpack.c.b16 %v807, %v806
    %v817 = vpack.c.b16 %v809, %v808
    %826 = vmatprep.subr.bf16.mxu0 0
    %827 = vmatpush1.bf16.msra.mxu0 %v810
    %828 = vmatprep.subr.bf16.mxu0 0
    %829 = vmatpush1.bf16.msra.mxu0 %v811
    %830 = vmatprep.subr.bf16.mxu0 0
    %831 = vmatpush1.bf16.msra.mxu0 %v812
    %832 = vmatprep.subr.bf16.mxu0 0
    %833 = vmatpush1.bf16.msra.mxu0 %v813
    %834 = vmatprep.subr.bf16.mxu0 0
    %835 = vmatpush1.bf16.msra.mxu0 %v814
    %836 = vmatprep.subr.bf16.mxu0 0
    %837 = vmatpush1.bf16.msra.mxu0 %v815
    %838 = vmatprep.subr.bf16.mxu0 0
    %839 = vmatpush1.bf16.msra.mxu0 %v816
    %840 = vmatprep.subr.bf16.mxu0 0
    %841 = vmatpush1.bf16.msra.mxu0 %v817
    %842 = vmatprep.subr.bf16.mxu0 0
    %843 = vmatpush1.bf16.msra.mxu0 0
    %844 = vmatprep.subr.bf16.mxu0 0
    %845 = vmatpush1.bf16.msra.mxu0 0
    %846 = vmatprep.subr.bf16.mxu0 0
    %847 = vmatpush1.bf16.msra.mxu0 0
    %848 = vmatprep.subr.bf16.mxu0 0
    %849 = vmatpush1.bf16.msra.mxu0 0
    %850 = vmatprep.subr.bf16.mxu0 0
    %851 = vmatpush1.bf16.msra.mxu0 0
    %852 = vmatprep.subr.bf16.mxu0 0
    %853 = vmatpush1.bf16.msra.mxu0 0
    %854 = vmatprep.subr.bf16.mxu0 0
    %855 = vmatpush1.bf16.msra.mxu0 0
    %856 = vmatprep.subr.bf16.mxu0 0
    %857 = vmatpush1.bf16.msra.mxu0 0
    %858 = vmatprep.mubr.bf16.mxu0 0
    %859 = vmatmul.mubr.bf16.gmra.mrb[0].mxu0 %v755
    %v860 = vpop.f32.mrb[0].mxu0
    %v861 = vadd.f32 %v776, %v860
    %v862 = vpop.f32.mrb[0].mxu0
    %v863 = vpop.f32.mrb[0].mxu0
    %v864 = vpop.f32.mrb[0].mxu0
    %865 = vdwg.mxu0
    %v866 = vmax.f32 %v861, 0.0
    %v867 = vpack.c.bf16 %v866, %v866
    %v868 = vld [vmem:[%s5] sm:$0xf]
    %v869 = vld [vmem:[%s5 + $0x4] sm:$0xf]
    %v870 = vld [vmem:[%s5 + $0x8] sm:$0xf]
    %v871 = vld [vmem:[%s5 + $0xc] sm:$0xf]
    %v872 = vld [vmem:[%s5 + $0x10] sm:$0xf]
    %v873 = vld [vmem:[%s5 + $0x14] sm:$0xf]
    %v874 = vld [vmem:[%s5 + $0x18] sm:$0xf]
    %v875 = vld [vmem:[%s5 + $0x1c] sm:$0xf]
    %v876 = vld [vmem:[%s5 + $0x20] sm:$0xf]
    %v877 = vld [vmem:[%s5 + $0x24] sm:$0xf]
    %v878 = vld [vmem:[%s5 + $0x28] sm:$0xf]
    %v879 = vld [vmem:[%s5 + $0x2c] sm:$0xf]
    %v880 = vld [vmem:[%s5 + $0x30] sm:$0xf]
    %v881 = vld [vmem:[%s5 + $0x34] sm:$0xf]
    %v882 = vld [vmem:[%s5 + $0x38] sm:$0xf]
    %v883 = vld [vmem:[%s5 + $0x3c] sm:$0xf]
    %v885 = vlaneseq
    %v886 = vshrl.u32 %v885, 7
    %v887 = vsub.s32 0, %v886
    %v888 = vrot.slane %v47, %v887
    %v906 = vunpack.c.l.b16 %v868
    %v907 = vunpack.c.l.b16 %v869
    %v908 = vunpack.c.l.b16 %v870
    %v909 = vunpack.c.l.b16 %v871
    %v910 = vunpack.c.l.b16 %v872
    %v911 = vunpack.c.l.b16 %v873
    %v912 = vunpack.c.l.b16 %v874
    %v913 = vunpack.c.l.b16 %v875
    %v914 = vunpack.c.l.b16 %v876
    %v915 = vunpack.c.l.b16 %v877
    %v916 = vunpack.c.l.b16 %v878
    %v917 = vunpack.c.l.b16 %v879
    %v918 = vunpack.c.l.b16 %v880
    %v919 = vunpack.c.l.b16 %v881
    %v920 = vunpack.c.l.b16 %v882
    %v921 = vunpack.c.l.b16 %v883
    %v922 = vpack.c.b16 %v907, %v906
    %v923 = vpack.c.b16 %v909, %v908
    %v924 = vpack.c.b16 %v911, %v910
    %v925 = vpack.c.b16 %v913, %v912
    %v926 = vpack.c.b16 %v915, %v914
    %v927 = vpack.c.b16 %v917, %v916
    %v928 = vpack.c.b16 %v919, %v918
    %v929 = vpack.c.b16 %v921, %v920
    %938 = vmatprep.subr.bf16.mxu0 0
    %939 = vmatpush1.bf16.msra.mxu0 %v922
    %940 = vmatprep.subr.bf16.mxu0 0
    %941 = vmatpush1.bf16.msra.mxu0 %v923
    %942 = vmatprep.subr.bf16.mxu0 0
    %943 = vmatpush1.bf16.msra.mxu0 %v924
    %944 = vmatprep.subr.bf16.mxu0 0
    %945 = vmatpush1.bf16.msra.mxu0 %v925
    %946 = vmatprep.subr.bf16.mxu0 0
    %947 = vmatpush1.bf16.msra.mxu0 %v926
    %948 = vmatprep.subr.bf16.mxu0 0
    %949 = vmatpush1.bf16.msra.mxu0 %v927
    %950 = vmatprep.subr.bf16.mxu0 0
    %951 = vmatpush1.bf16.msra.mxu0 %v928
    %952 = vmatprep.subr.bf16.mxu0 0
    %953 = vmatpush1.bf16.msra.mxu0 %v929
    %954 = vmatprep.subr.bf16.mxu0 0
    %955 = vmatpush1.bf16.msra.mxu0 0
    %956 = vmatprep.subr.bf16.mxu0 0
    %957 = vmatpush1.bf16.msra.mxu0 0
    %958 = vmatprep.subr.bf16.mxu0 0
    %959 = vmatpush1.bf16.msra.mxu0 0
    %960 = vmatprep.subr.bf16.mxu0 0
    %961 = vmatpush1.bf16.msra.mxu0 0
    %962 = vmatprep.subr.bf16.mxu0 0
    %963 = vmatpush1.bf16.msra.mxu0 0
    %964 = vmatprep.subr.bf16.mxu0 0
    %965 = vmatpush1.bf16.msra.mxu0 0
    %966 = vmatprep.subr.bf16.mxu0 0
    %967 = vmatpush1.bf16.msra.mxu0 0
    %968 = vmatprep.subr.bf16.mxu0 0
    %969 = vmatpush1.bf16.msra.mxu0 0
    %970 = vmatprep.mubr.bf16.mxu0 0
    %971 = vmatmul.mubr.bf16.gmra.mrb[0].mxu0 %v867
    %v972 = vpop.f32.mrb[0].mxu0
    %v973 = vadd.f32 %v888, %v972
    %v974 = vpop.f32.mrb[0].mxu0
    %v975 = vpop.f32.mrb[0].mxu0
    %v976 = vpop.f32.mrb[0].mxu0
    %977 = vdwg.mxu0
    %978 = vst [vmem:[%s7] sm:$0xff] %v973
    // Predicated region
    $region34: #{discriminator_simple_forward.1} parent=1 // pred_check
      _
    $region35: #{discriminator_simple_forward.1} parent=1 // pred_check_branch
      %980 = sbr.rel (0) target = $region37
    $region36: #{discriminator_simple_forward.1} parent=1 // pred_region
      _
    $region37: #{discriminator_simple_forward.1} parent=1 // pred_fallthru
      _
    // Predicated region
    $region38: #{discriminator_simple_forward.1} parent=1 // pred_check
      _
    $region39: #{discriminator_simple_forward.1} parent=1 // pred_check_branch
      %982 = sbr.rel (0) target = $region41
    $region40: #{discriminator_simple_forward.1} parent=1 // pred_region
      _
    $region41: #{discriminator_simple_forward.1} parent=1 // pred_fallthru
      _
    %983 = vsyncpa [#allocation3], 1

</llo_original>
